<compile_context>
chip_gen: v6e
topology: v6e:2x2x1
jax: 0.10.0
libtpu: 0.0.40
codegen_flags: <defaults>
</compile_context>

<pallas_src>
import jax
import jax.numpy as jnp
from jax.experimental import pallas as pl
from jax.experimental.pallas import tpu as pltpu

LANE = 128
SUB = 8


def _make_iou_kernel(bs, rows, num_blocks):
    """Build the partial-sum kernel with static tiling constants closed over."""
    last = num_blocks - 1
    rem_rows = rows - last * bs          # valid rows in the last block (1..bs)
    last_is_full = (rem_rows == bs)

    def _accumulate(p_ref, t_ref, acc_ref, valid_rows):
        x = p_ref[...].astype(jnp.float32)
        # sigmoid(x) == 0.5 * tanh(x / 2) + 0.5  (single EUP op)
        p = 0.5 * jnp.tanh(0.5 * x) + 0.5
        t = t_ref[...].astype(jnp.float32)
        if valid_rows is not None:
            # Partial last block: rows >= valid_rows hold garbage VMEM (stale
            # data / NaNs) -> zero them BEFORE accumulating.
            row_ids = jax.lax.broadcasted_iota(jnp.int32, (bs, LANE), 0)
            ok = row_ids < valid_rows
            p = jnp.where(ok, p, 0.0)
            t = jnp.where(ok, t, 0.0)
        # (bs,128) -> (bs//8, 8, 128); reducing axis 0 is pure VPU adds of
        # aligned vregs -- no cross-lane XLU work per grid step.
        acc_ref[0, 0] += jnp.sum((p * t).reshape(-1, SUB, LANE), axis=0)
        acc_ref[0, 1] += jnp.sum(p.reshape(-1, SUB, LANE), axis=0)
        acc_ref[0, 2] += jnp.sum(t.reshape(-1, SUB, LANE), axis=0)

    def kernel(p_ref, t_ref, acc_ref):
        s = pl.program_id(0)
        b = pl.program_id(1)
        g = s * pl.num_programs(1) + b       # global block index

        @pl.when(b == 0)
        def _():
            acc_ref[...] = jnp.zeros_like(acc_ref)

        if last_is_full:
            # All real blocks are full; just skip dummy (out-of-range) blocks.
            @pl.when(g < num_blocks)
            def _():
                _accumulate(p_ref, t_ref, acc_ref, None)
        else:
            @pl.when(g < last)
            def _():
                _accumulate(p_ref, t_ref, acc_ref, None)

            @pl.when(g == last)
            def _():
                _accumulate(p_ref, t_ref, acc_ref, rem_rows)

    return kernel


def iou_loss(preds, targets, smooth=1.0, block_rows=4096):
    """Pallas TPU equivalent of IoULoss.forward(preds, targets, smooth)."""
    p = preds.reshape(-1)
    t = targets.reshape(-1)
    n = p.shape[0]

    rows = n // LANE                  # complete lane-rows handled by the kernel
    bulk = rows * LANE

    # Sub-128-element remainder: tiny, plain JAX.
    if bulk < n:
        pt = jax.nn.sigmoid(p[bulk:].astype(jnp.float32))
        tt = t[bulk:].astype(jnp.float32)
        tail = jnp.stack([jnp.sum(pt * tt), jnp.sum(pt), jnp.sum(tt)])
    else:
        tail = jnp.zeros((3,), jnp.float32)

    if rows > 0:
        if bulk == n:
            # Free, metadata-only reshape: no HBM copy on the aligned path.
            p2 = p.reshape(rows, LANE)
            t2 = t.reshape(rows, LANE)
        else:
            # n not a multiple of 128 (rare for conv feature maps): the slice
            # re-materializes; unavoidable without 1-D blocks.
            p2 = p[:bulk].reshape(rows, LANE)
            t2 = t[:bulk].reshape(rows, LANE)

        # Block rows: multiple of 8, ~2 MiB f32 per input tile at the default.
        bs = min(block_rows, pl.cdiv(rows, SUB) * SUB)
        num_blocks = pl.cdiv(rows, bs)

        # Always split 2 ways so both v7x TensorCores stay busy; dummy blocks
        # (when num_blocks is odd / ==1) are clamped + skipped in the kernel.
        num_slices = 2
        blocks_per_slice = pl.cdiv(num_blocks, num_slices)

        def in_map(s, b):
            g = s * blocks_per_slice + b
            return (jnp.minimum(g, num_blocks - 1), 0)   # keep dummy DMAs in bounds

        kernel = _make_iou_kernel(bs, rows, num_blocks)

        partials = pl.pallas_call(
            kernel,
            out_shape=jax.ShapeDtypeStruct((num_slices, 3, SUB, LANE), jnp.float32),
            grid_spec=pltpu.PrefetchScalarGridSpec(
                num_scalar_prefetch=0,
                grid=(num_slices, blocks_per_slice),
                in_specs=[
                    pl.BlockSpec((bs, LANE), in_map),
                    pl.BlockSpec((bs, LANE), in_map),
                ],
                out_specs=pl.BlockSpec((1, 3, SUB, LANE), lambda s, b: (s, 0, 0, 0)),
            ),
            compiler_params=pltpu.CompilerParams(
                dimension_semantics=("parallel", "arbitrary"),
                vmem_limit_bytes=32 * 1024 * 1024,
            ),
        )(p2, t2)

        sums = jnp.sum(partials, axis=(0, 2, 3)) + tail   # (3,): inter, sum_p, sum_t
    else:
        sums = tail

    inter = sums[0]
    total = sums[1] + sums[2]
    union = total - inter
    iou = (inter + smooth) / (union + smooth)
    return 1.0 - iou


def iou_loss_ref(preds, targets, smooth=1.0):
    """Pure-JAX reference matching the PyTorch module."""
    p = jax.nn.sigmoid(preds.astype(jnp.float32)).reshape(-1)
    t = targets.astype(jnp.float32).reshape(-1)
    inter = jnp.sum(p * t)
    total = jnp.sum(p + t)
    union = total - inter
    return 1.0 - (inter + smooth) / (union + smooth)


if __name__ == "__main__":
    key = jax.random.PRNGKey(0)
    k1, k2 = jax.random.split(key)

    # Small NCHW-like shapes consistent with a segmentation head.
    preds = jax.random.normal(k1, (2, 4, 16, 16), dtype=jnp.float32)
    targets = (jax.random.uniform(k2, (2, 4, 16, 16)) > 0.5).astype(jnp.float32)

    out = iou_loss(preds, targets, smooth=1.0)
    out = jax.block_until_ready(out)

    ref = iou_loss_ref(preds, targets, smooth=1.0)
    assert jnp.allclose(out, ref, atol=1e-5, rtol=1e-5), (out, ref)

    print("KERNEL_OK")
</pallas_src>

<mosaic_0001>
module attributes {stable_mosaic.version = 11 : i64} {
  func.func @kernel(%arg0: i32, %arg1: i32, %arg2: memref<16x128xf32, #tpu.memory_space<vmem>>, %arg3: memref<16x128xf32, #tpu.memory_space<vmem>>, %arg4: memref<1x3x8x128xf32, #tpu.memory_space<vmem>>) attributes {dimension_semantics = [#tpu.dimension_semantics<parallel>, #tpu.dimension_semantics<arbitrary>], iteration_bounds = array<i64: 2, 1>, scalar_prefetch = 0 : i64, scratch_operands = 0 : i64, tpu.core_type = #tpu.core_type<tc>, window_params = [{transform_indices = @transform_0, window_bounds = array<i64: 16, 128>}, {transform_indices = @transform_1, window_bounds = array<i64: 16, 128>}, {transform_indices = @transform_2, window_bounds = array<i64: 1, 3, 8, 128>}]} {
    %c1_i32 = arith.constant 1 : i32
    %0 = arith.muli %arg0, %c1_i32 : i32
    %1 = arith.addi %0, %arg1 : i32
    %c0_i32 = arith.constant 0 : i32
    %2 = arith.cmpi eq, %arg1, %c0_i32 : i32
    %3 = arith.extui %2 : i1 to i32
    %c0_i32_0 = arith.constant 0 : i32
    %4 = arith.cmpi ne, %3, %c0_i32_0 : i32
    scf.if %4 {
      %cst = arith.constant 0.000000e+00 : f32
      %8 = vector.broadcast %cst : f32 to vector<1x3x8x128xf32>
      %c0 = arith.constant 0 : index
      %c0_3 = arith.constant 0 : index
      %c0_4 = arith.constant 0 : index
      %c0_5 = arith.constant 0 : index
      %9 = vector.load %arg4[%c0, %c0_3, %c0_4, %c0_5] : memref<1x3x8x128xf32, #tpu.memory_space<vmem>>, vector<1x3x8x128xf32>
      tpu.vector_store %arg4[%c0, %c0_3, %c0_4, %c0_5], %8 {strides = array<i32>} : memref<1x3x8x128xf32, #tpu.memory_space<vmem>>, vector<1x3x8x128xf32>,
    } else {
    }
    %c1_i32_1 = arith.constant 1 : i32
    %5 = arith.cmpi slt, %1, %c1_i32_1 : i32
    %6 = arith.extui %5 : i1 to i32
    %c0_i32_2 = arith.constant 0 : i32
    %7 = arith.cmpi ne, %6, %c0_i32_2 : i32
    scf.if %7 {
      %c0 = arith.constant 0 : index
      %c0_3 = arith.constant 0 : index
      %8 = vector.load %arg2[%c0, %c0_3] : memref<16x128xf32, #tpu.memory_space<vmem>>, vector<16x128xf32>
      %cst = arith.constant 5.000000e-01 : f32
      %9 = vector.broadcast %cst : f32 to vector<16x128xf32>
      %10 = arith.mulf %9, %8 : vector<16x128xf32>
      %11 = math.tanh %10 : vector<16x128xf32>
      %cst_4 = arith.constant 5.000000e-01 : f32
      %12 = vector.broadcast %cst_4 : f32 to vector<16x128xf32>
      %13 = arith.mulf %12, %11 : vector<16x128xf32>
      %cst_5 = arith.constant 5.000000e-01 : f32
      %14 = vector.broadcast %cst_5 : f32 to vector<16x128xf32>
      %15 = arith.addf %13, %14 : vector<16x128xf32>
      %c0_6 = arith.constant 0 : index
      %c0_7 = arith.constant 0 : index
      %16 = vector.load %arg3[%c0_6, %c0_7] : memref<16x128xf32, #tpu.memory_space<vmem>>, vector<16x128xf32>
      %c0_8 = arith.constant 0 : index
      %c0_9 = arith.constant 0 : index
      %c0_10 = arith.constant 0 : index
      %c0_11 = arith.constant 0 : index
      %17 = vector.load %arg4[%c0_8, %c0_9, %c0_10, %c0_11] : memref<1x3x8x128xf32, #tpu.memory_space<vmem>>, vector<1x1x8x128xf32>
      %18 = vector.shape_cast %17 : vector<1x1x8x128xf32> to vector<8x128xf32>
      %19 = arith.mulf %15, %16 : vector<16x128xf32>
      %20 = vector.shape_cast %19 : vector<16x128xf32> to vector<2x8x128xf32>
      %cst_12 = arith.constant dense<0.000000e+00> : vector<8x128xf32>
      %21 = vector.multi_reduction <add>, %20, %cst_12 [0] : vector<2x8x128xf32> to vector<8x128xf32>
      %22 = arith.addf %18, %21 : vector<8x128xf32>
      %c0_13 = arith.constant 0 : index
      %c0_14 = arith.constant 0 : index
      %c0_15 = arith.constant 0 : index
      %c0_16 = arith.constant 0 : index
      %23 = vector.load %arg4[%c0_13, %c0_14, %c0_15, %c0_16] : memref<1x3x8x128xf32, #tpu.memory_space<vmem>>, vector<1x1x8x128xf32>
      %24 = vector.shape_cast %23 : vector<1x1x8x128xf32> to vector<8x128xf32>
      %25 = vector.shape_cast %22 : vector<8x128xf32> to vector<1x1x8x128xf32>
      tpu.vector_store %arg4[%c0_13, %c0_14, %c0_15, %c0_16], %25 {strides = array<i32>} : memref<1x3x8x128xf32, #tpu.memory_space<vmem>>, vector<1x1x8x128xf32>,
      %c0_17 = arith.constant 0 : index
      %c1 = arith.constant 1 : index
      %c0_18 = arith.constant 0 : index
      %c0_19 = arith.constant 0 : index
      %26 = vector.load %arg4[%c0_17, %c1, %c0_18, %c0_19] : memref<1x3x8x128xf32, #tpu.memory_space<vmem>>, vector<1x1x8x128xf32>
      %27 = vector.shape_cast %26 : vector<1x1x8x128xf32> to vector<8x128xf32>
      %28 = vector.shape_cast %15 : vector<16x128xf32> to vector<2x8x128xf32>
      %cst_20 = arith.constant dense<0.000000e+00> : vector<8x128xf32>
      %29 = vector.multi_reduction <add>, %28, %cst_20 [0] : vector<2x8x128xf32> to vector<8x128xf32>
      %30 = arith.addf %27, %29 : vector<8x128xf32>
      %c0_21 = arith.constant 0 : index
      %c1_22 = arith.constant 1 : index
      %c0_23 = arith.constant 0 : index
      %c0_24 = arith.constant 0 : index
      %31 = vector.load %arg4[%c0_21, %c1_22, %c0_23, %c0_24] : memref<1x3x8x128xf32, #tpu.memory_space<vmem>>, vector<1x1x8x128xf32>
      %32 = vector.shape_cast %31 : vector<1x1x8x128xf32> to vector<8x128xf32>
      %33 = vector.shape_cast %30 : vector<8x128xf32> to vector<1x1x8x128xf32>
      tpu.vector_store %arg4[%c0_21, %c1_22, %c0_23, %c0_24], %33 {strides = array<i32>} : memref<1x3x8x128xf32, #tpu.memory_space<vmem>>, vector<1x1x8x128xf32>,
      %c0_25 = arith.constant 0 : index
      %c2 = arith.constant 2 : index
      %c0_26 = arith.constant 0 : index
      %c0_27 = arith.constant 0 : index
      %34 = vector.load %arg4[%c0_25, %c2, %c0_26, %c0_27] : memref<1x3x8x128xf32, #tpu.memory_space<vmem>>, vector<1x1x8x128xf32>
      %35 = vector.shape_cast %34 : vector<1x1x8x128xf32> to vector<8x128xf32>
      %36 = vector.shape_cast %16 : vector<16x128xf32> to vector<2x8x128xf32>
      %cst_28 = arith.constant dense<0.000000e+00> : vector<8x128xf32>
      %37 = vector.multi_reduction <add>, %36, %cst_28 [0] : vector<2x8x128xf32> to vector<8x128xf32>
      %38 = arith.addf %35, %37 : vector<8x128xf32>
      %c0_29 = arith.constant 0 : index
      %c2_30 = arith.constant 2 : index
      %c0_31 = arith.constant 0 : index
      %c0_32 = arith.constant 0 : index
      %39 = vector.load %arg4[%c0_29, %c2_30, %c0_31, %c0_32] : memref<1x3x8x128xf32, #tpu.memory_space<vmem>>, vector<1x1x8x128xf32>
      %40 = vector.shape_cast %39 : vector<1x1x8x128xf32> to vector<8x128xf32>
      %41 = vector.shape_cast %38 : vector<8x128xf32> to vector<1x1x8x128xf32>
      tpu.vector_store %arg4[%c0_29, %c2_30, %c0_31, %c0_32], %41 {strides = array<i32>} : memref<1x3x8x128xf32, #tpu.memory_space<vmem>>, vector<1x1x8x128xf32>,
    } else {
    }
    return
  }
  func.func @transform_0(%arg0: i32, %arg1: i32) -> (i32, i32) {
    %c1_i32 = arith.constant 1 : i32
    %0 = arith.muli %arg0, %c1_i32 : i32
    %1 = arith.addi %0, %arg1 : i32
    %c0_i32 = arith.constant 0 : i32
    %2 = arith.minsi %1, %c0_i32 : i32
    %c0_i32_0 = arith.constant 0 : i32
    %c0_i32_1 = arith.constant 0 : i32
    return %2, %c0_i32_0 : i32, i32
  }
  func.func @transform_1(%arg0: i32, %arg1: i32) -> (i32, i32) {
    %c1_i32 = arith.constant 1 : i32
    %0 = arith.muli %arg0, %c1_i32 : i32
    %1 = arith.addi %0, %arg1 : i32
    %c0_i32 = arith.constant 0 : i32
    %2 = arith.minsi %1, %c0_i32 : i32
    %c0_i32_0 = arith.constant 0 : i32
    %c0_i32_1 = arith.constant 0 : i32
    return %2, %c0_i32_0 : i32, i32
  }
  func.func @transform_2(%arg0: i32, %arg1: i32) -> (i32, i32, i32, i32) {
    %c0_i32 = arith.constant 0 : i32
    %c0_i32_0 = arith.constant 0 : i32
    %c0_i32_1 = arith.constant 0 : i32
    %c0_i32_2 = arith.constant 0 : i32
    return %arg0, %c0_i32, %c0_i32_0, %c0_i32_1 : i32, i32, i32, i32
  }
}

</mosaic_0001>

<llo_original>
// kernel: tpu_custom_call.1
$region0: #{tpu_custom_call.1}
  #allocation0 [shape = 'u32[]', space=smem, size = 0x4, offset = 0x4, fixed_abs, tag = 'smem constant byte address 0x4 - core index']
  #allocation1 [shape = 'u32[144,128]{1,0:T(1,128)}', space=vmem, size = 0x12000, scoped, tag = 'internal scratch']
  %s0 = inlined_call_operand.hbm [shape: f32[16,128], index: 0, kind: input, shape index: {}]
  %s1 = inlined_call_operand.hbm [shape: f32[16,128], index: 1, kind: input, shape index: {}]
  %s2 = inlined_call_operand.hbm [shape: f32[2,3,8,128], index: 2, kind: output, shape index: {}]
  %s3 = sld [smem:[#allocation0]]
  $region57: #{tpu_custom_call.1} parent=0
    _
  %s5 = ssub.s32 1, %s3
  %s6 = scalar_select 0, %s5, %s3
  $region1: #{tpu_custom_call.1} parent=0
    #allocation2 [shape = 'u8[16384]{0}', space=vmem, size = 0x4000, scoped, tag = 'input window, operand 0']
    #allocation3 [shape = 's32[2]{0}', space=sflag, size = 0x8, scoped, tag = 'scoped memory for tpu_custom_call.1']
    #allocation4 [shape = 's32[2]{0}', space=sflag, size = 0x8, scoped, tag = 'scoped memory for tpu_custom_call.1']
    #allocation5 [shape = 'u8[16384]{0}', space=vmem, size = 0x4000, scoped, tag = 'input window, operand 1']
    #allocation6 [shape = 's32[2]{0}', space=sflag, size = 0x8, scoped, tag = 'scoped memory for tpu_custom_call.1']
    #allocation7 [shape = 'u8[24576]{0}', space=vmem, size = 0x6000, scoped, tag = 'output window, operand 0']
    %7 = vsyncpa [#allocation3], 0
    %s8 = scalar_lea.sflag [#allocation3], 1
    %9 = vsyncpa %s8, 0
    %10 = vsyncpa [#allocation6], 0
    %s11 = scalar_lea.sflag [#allocation6], 1
    %12 = vsyncpa %s11, 0
    %13 = vsyncpa [#allocation4], 0
    %s14 = scalar_lea.sflag [#allocation4], 1
    %15 = vsyncpa %s14, 0
    loop: start=0, step=1, limit=4
    $region2: #{tpu_custom_call.1} parent=1 // loop_pre_header
      _
    $region3: #{tpu_custom_call.1} parent=1 // loop_header
      %s17 = sphi 0, %s21
      %p18 = scmp.ge.s32.totalorder %s17, 4
      %s24 = sphi 0, %s36
      %s25 = sphi 0, %s32
      %s26 = sphi 0, %s24
      %s27 = sphi 0, %s25
      %s28 = sphi 0, %s26
      %s29 = sphi 0, %s27
      %s45 = sphi 0, %s47
      %s48 = sphi 0, %s45
      %s49 = sphi 0, %s48
      %s65 = sphi 0, %s49
      %s77 = sphi 0, %s79
      %s80 = sphi 0, %s77
      %s81 = sphi 0, %s80
      %s97 = sphi 0, %s81
      %s103 = sphi 0, %s105
      %s106 = sphi 0, %s103
      %s107 = sphi 0, %s106
      %s123 = sphi 0, %s107
    $region4: #{tpu_custom_call.1} parent=1 // loop_header_branch
      %20 = sbr.rel (%p18) target = $region8
    $region5: #{tpu_custom_call.1} parent=1 // loop_body
      %s22 = ssub.s32 %s17, 1
      %s23 = ssub.s32 %s17, 2
      %s30 = sadd.s32 1, %s25
      %p31 = scmp.ge.s32.totalorder %s30, 1
      %s32 = scalar_select %p31, 0, %s30
      %s33 = sadd.s32 1, %s24
      %s34 = scalar_select %p31, %s33, %s24
      %p35 = scmp.ge.s32.totalorder %s34, 2
      %s36 = scalar_select %p35, 0, %s34
      %s37 = sadd.s32 %s24, %s25
      %p38 = scmp.lt.s32.totalorder %s37, 0
      %s39 = scalar_select %p38, %s37, 0
      %s40 = sadd.s32 %s36, %s32
      %p41 = scmp.lt.s32.totalorder %s40, 0
      %s42 = scalar_select %p41, %s40, 0
      %s43 = ssub.s32 %s39, %s42
      %p44 = scmp.eq.s32.totalorder %s43, 0
      %s46 = sadd.s32 %s45, 1
      %s47 = scalar_select %p44, %s45, %s46
      %p50 = pneg %p44
      %p51 = scmp.eq.s32.totalorder %s17, 1
      %p52 = por %p50, %p51
      %p53 = scmp.ne.s32.totalorder %s45, %s48
      %p54 = scmp.eq.s32.totalorder %s17, 0
      %p55 = por %p53, %p54
      %p56 = scmp.ne.s32.totalorder %s45, %s48
      %p57 = scmp.eq.s32.totalorder %s22, 1
      %p58 = por %p56, %p57
      %p59 = scmp.ne.s32.totalorder %s48, %s49
      %p60 = scmp.eq.s32.totalorder %s22, 0
      %p61 = por %p59, %p60
      %p62 = scmp.ne.s32.totalorder %s48, %s49
      %p63 = scmp.eq.s32.totalorder %s23, 1
      %p64 = por %p62, %p63
      %p66 = scmp.ne.s32.totalorder %s49, %s65
      %p67 = scmp.eq.s32.totalorder %s23, 0
      %p68 = por %p66, %p67
      %s69 = sadd.s32 %s24, %s25
      %p70 = scmp.lt.s32.totalorder %s69, 0
      %s71 = scalar_select %p70, %s69, 0
      %s72 = sadd.s32 %s36, %s32
      %p73 = scmp.lt.s32.totalorder %s72, 0
      %s74 = scalar_select %p73, %s72, 0
      %s75 = ssub.s32 %s71, %s74
      %p76 = scmp.eq.s32.totalorder %s75, 0
      %s78 = sadd.s32 %s77, 1
      %s79 = scalar_select %p76, %s77, %s78
      %p82 = pneg %p76
      %p83 = scmp.eq.s32.totalorder %s17, 1
      %p84 = por %p82, %p83
      %p85 = scmp.ne.s32.totalorder %s77, %s80
      %p86 = scmp.eq.s32.totalorder %s17, 0
      %p87 = por %p85, %p86
      %p88 = scmp.ne.s32.totalorder %s77, %s80
      %p89 = scmp.eq.s32.totalorder %s22, 1
      %p90 = por %p88, %p89
      %p91 = scmp.ne.s32.totalorder %s80, %s81
      %p92 = scmp.eq.s32.totalorder %s22, 0
      %p93 = por %p91, %p92
      %p94 = scmp.ne.s32.totalorder %s80, %s81
      %p95 = scmp.eq.s32.totalorder %s23, 1
      %p96 = por %p94, %p95
      %p98 = scmp.ne.s32.totalorder %s81, %s97
      %p99 = scmp.eq.s32.totalorder %s23, 0
      %p100 = por %p98, %p99
      %s101 = ssub.s32 %s24, %s36
      %p102 = scmp.eq.s32.totalorder %s101, 0
      %s104 = sadd.s32 %s103, 1
      %s105 = scalar_select %p102, %s103, %s104
      %p108 = pneg %p102
      %p109 = scmp.eq.s32.totalorder %s17, 1
      %p110 = por %p108, %p109
      %p111 = scmp.ne.s32.totalorder %s103, %s106
      %p112 = scmp.eq.s32.totalorder %s17, 0
      %p113 = por %p111, %p112
      %p114 = scmp.ne.s32.totalorder %s103, %s106
      %p115 = scmp.eq.s32.totalorder %s22, 1
      %p116 = por %p114, %p115
      %p117 = scmp.ne.s32.totalorder %s106, %s107
      %p118 = scmp.eq.s32.totalorder %s22, 0
      %p119 = por %p117, %p118
      %p120 = scmp.ne.s32.totalorder %s106, %s107
      %p121 = scmp.eq.s32.totalorder %s23, 1
      %p122 = por %p120, %p121
      %p124 = scmp.ne.s32.totalorder %s107, %s123
      %p125 = scmp.eq.s32.totalorder %s23, 0
      %p126 = por %p124, %p125
      %p127 = scmp.le.s32.totalorder 1, %s17
      %p128 = scmp.lt.s32.totalorder %s17, 3
      %p129 = pnand %p127, %p128
      %p130 = pneg %p129
      // Predicated region
      $region9: #{tpu_custom_call.1} parent=5 // pred_check
        _
      $region10: #{tpu_custom_call.1} parent=5 // pred_check_branch
        %132 = sbr.rel (%p129) target = $region12
      $region11: #{tpu_custom_call.1} parent=5 // pred_region
        %s133 = ssub.s32 %s17, 1
      $region12: #{tpu_custom_call.1} parent=5 // pred_fallthru
        _
      %p134 = scmp.lt.s32.totalorder %s17, 2
      // Predicated region
      $region13: #{tpu_custom_call.1} parent=5 // pred_check
        %p135 = pneg %p134
      $region14: #{tpu_custom_call.1} parent=5 // pred_check_branch
        %137 = sbr.rel (%p135) target = $region16
      $region15: #{tpu_custom_call.1} parent=5 // pred_region
        // Predicated region
        $region17: #{tpu_custom_call.1} parent=15 // pred_check
          %p138 = pneg %p55
        $region18: #{tpu_custom_call.1} parent=15 // pred_check_branch
          %140 = sbr.rel (%p138) target = $region20
        $region19: #{tpu_custom_call.1} parent=15 // pred_region
          %s141 = sand.u32 %s45, 1
          %s142 = scalar_lea.sflag [#allocation3], %s141
          %s143 = sand.u32 %s45, 1
          %s144 = smul.addr %s143, 16
          %s145 = scalar_lea.vmem [#allocation2], %s144
          %s146 = sadd.s32 %s24, %s25
          %p147 = scmp.lt.s32.totalorder %s146, 0
          %s148 = scalar_select %p147, %s146, 0
          %s149 = smul.u32 2, %s148
          %s151 = ssub.s32 256, 256
          %152 = vsyncadd %s142, %s151
          %s153 = smul.addr %s149, 128
          %s154 = scalar_lea.hbm %s0, %s153
          %s155 = sshll.u32 %s145, 4
          %s156 = int_to_ptr.vmem [resolvable:$true] %s155
          %161 = dma.hbm_to_vmem [thread:$0]  %s154, 256, %s156, %s142, 128, 128, 8
        $region20: #{tpu_custom_call.1} parent=15 // pred_fallthru
          _
        // Predicated region
        $region21: #{tpu_custom_call.1} parent=15 // pred_check
          %p162 = pneg %p87
        $region22: #{tpu_custom_call.1} parent=15 // pred_check_branch
          %164 = sbr.rel (%p162) target = $region24
        $region23: #{tpu_custom_call.1} parent=15 // pred_region
          %s165 = sand.u32 %s77, 1
          %s166 = scalar_lea.sflag [#allocation6], %s165
          %s167 = sand.u32 %s77, 1
          %s168 = smul.addr %s167, 16
          %s169 = scalar_lea.vmem [#allocation5], %s168
          %s170 = sadd.s32 %s24, %s25
          %p171 = scmp.lt.s32.totalorder %s170, 0
          %s172 = scalar_select %p171, %s170, 0
          %s173 = smul.u32 2, %s172
          %s175 = ssub.s32 256, 256
          %176 = vsyncadd %s166, %s175
          %s177 = smul.addr %s173, 128
          %s178 = scalar_lea.hbm %s1, %s177
          %s179 = sshll.u32 %s169, 4
          %s180 = int_to_ptr.vmem [resolvable:$true] %s179
          %185 = dma.hbm_to_vmem [thread:$0]  %s178, 256, %s180, %s166, 128, 128, 8
        $region24: #{tpu_custom_call.1} parent=15 // pred_fallthru
          _
      $region16: #{tpu_custom_call.1} parent=5 // pred_fallthru
        _
      %p186 = scmp.le.s32.totalorder 1, %s17
      %p187 = scmp.lt.s32.totalorder %s17, 3
      %p188 = pnand %p186, %p187
      %p189 = pneg %p188
      // Predicated region
      $region25: #{tpu_custom_call.1} parent=5 // pred_check
        _
      $region26: #{tpu_custom_call.1} parent=5 // pred_check_branch
        %191 = sbr.rel (%p188) target = $region28
      $region27: #{tpu_custom_call.1} parent=5 // pred_region
        %s192 = ssub.s32 %s17, 1
        %s193 = sand.u32 %s48, 1
        %s194 = scalar_lea.sflag [#allocation3], %s193
        %s195 = sand.u32 %s48, 1
        %s196 = smul.addr %s195, 16
        %s197 = scalar_lea.vmem [#allocation2], %s196
        // Predicated region
        $region29: #{tpu_custom_call.1} parent=27 // pred_check
          %p198 = pneg %p61
        $region30: #{tpu_custom_call.1} parent=27 // pred_check_branch
          %200 = sbr.rel (%p198) target = $region32
        $region31: #{tpu_custom_call.1} parent=27 // pred_region
          %201 = dma.done %s194, 256
        $region32: #{tpu_custom_call.1} parent=27 // pred_fallthru
          _
        %s202 = sand.u32 %s80, 1
        %s203 = scalar_lea.sflag [#allocation6], %s202
        %s204 = sand.u32 %s80, 1
        %s205 = smul.addr %s204, 16
        %s206 = scalar_lea.vmem [#allocation5], %s205
        // Predicated region
        $region33: #{tpu_custom_call.1} parent=27 // pred_check
          %p207 = pneg %p93
        $region34: #{tpu_custom_call.1} parent=27 // pred_check_branch
          %209 = sbr.rel (%p207) target = $region36
        $region35: #{tpu_custom_call.1} parent=27 // pred_region
          %210 = dma.done %s203, 256
        $region36: #{tpu_custom_call.1} parent=27 // pred_fallthru
          _
        %s211 = sand.u32 %s48, 1
        %s212 = scalar_lea.sflag [#allocation3], %s211
        %s213 = sand.u32 %s48, 1
        %s214 = smul.addr %s213, 16
        %s215 = scalar_lea.vmem [#allocation2], %s214
        %p216 = pneg %p61
        %p217 = pneg %p58
        %s218 = sand.u32 %s80, 1
        %s219 = scalar_lea.sflag [#allocation6], %s218
        %s220 = sand.u32 %s80, 1
        %s221 = smul.addr %s220, 16
        %s222 = scalar_lea.vmem [#allocation5], %s221
        %p223 = pneg %p93
        %p224 = pneg %p90
        %p225 = pneg %p119
        %p226 = pneg %p116
        %s227 = sand.u32 %s106, 1
        %s228 = scalar_lea.sflag [#allocation4], %s227
        %s229 = sand.u32 %s106, 1
        %s230 = smul.addr %s229, 24
        %s231 = scalar_lea.vmem [#allocation7], %s230
        %s232 = sadd.s32 %s26, %s27
        %p233 = scmp.lt.s32.totalorder %s232, 0
        %s234 = scalar_select %p233, %s232, 0
        %s235 = smul.u32 2, %s234
        %s236 = sadd.s32 %s26, %s27
        %p237 = scmp.lt.s32.totalorder %s236, 0
        %s238 = scalar_select %p237, %s236, 0
        %s239 = smul.u32 2, %s238
        %s240 = sadd.s32 %s26, %s27
        %p241 = scmp.eq.s32.totalorder %s27, 0
        // Predicated region
        $region37: #{tpu_custom_call.1} parent=27 // pred_check
          %p242 = pneg %p241
        $region38: #{tpu_custom_call.1} parent=27 // pred_check_branch
          %244 = sbr.rel (%p242) target = $region40
        $region39: #{tpu_custom_call.1} parent=27 // pred_region
          %245 = vst [vmem:[%s231] sm:$0xff] 0.0
          %246 = vst [vmem:[%s231 + $0x8] sm:$0xff] 0.0
          %247 = vst [vmem:[%s231 + $0x10] sm:$0xff] 0.0
        $region40: #{tpu_custom_call.1} parent=27 // pred_fallthru
          _
        %p248 = scmp.lt.s32.totalorder %s240, 1
        // Predicated region
        $region41: #{tpu_custom_call.1} parent=27 // pred_check
          %p249 = pneg %p248
        $region42: #{tpu_custom_call.1} parent=27 // pred_check_branch
          %251 = sbr.rel (%p249) target = $region44
        $region43: #{tpu_custom_call.1} parent=27 // pred_region
          %v252 = vld [vmem:[%s197] sm:$0xff]
          %v253 = vld [vmem:[%s197 + $0x8] sm:$0xff]
          %v254 = vmul.f32 %v252, 0.5
          %v255 = vmul.f32 %v253, 0.5
          %v256 = vtanh.pop %v254
          %v257 = vtanh.pop %v255
          %v258 = vmul.f32 %v256, 0.5
          %v259 = vmul.f32 %v257, 0.5
          %v260 = vadd.f32 %v258, 0.5
          %v261 = vadd.f32 %v259, 0.5
          %v262 = vld [vmem:[%s206] sm:$0xff]
          %v263 = vld [vmem:[%s206 + $0x8] sm:$0xff]
          %v264 = vld [vmem:[%s231] sm:$0xff]
          %v265 = vmul.f32 %v260, %v262
          %v266 = vmul.f32 %v261, %v263
          %v267 = vadd.f32 %v265, %v266
          %v268 = vadd.f32 %v264, %v267
          %269 = vst [vmem:[%s231] sm:$0xff] %v268
          %s270 = scalar_lea.vmem %s231, 8 [#allocation7]
          %v271 = vld [vmem:[%s270] sm:$0xff]
          %v272 = vadd.f32 %v260, %v261
          %v273 = vadd.f32 %v271, %v272
          %274 = vst [vmem:[%s270] sm:$0xff] %v273
          %s275 = scalar_lea.vmem %s231, 16 [#allocation7]
          %v276 = vld [vmem:[%s275] sm:$0xff]
          %v277 = vadd.f32 %v262, %v263
          %v278 = vadd.f32 %v276, %v277
          %279 = vst [vmem:[%s275] sm:$0xff] %v278
        $region44: #{tpu_custom_call.1} parent=27 // pred_fallthru
          _
        %s280 = sand.u32 %s106, 1
        %s281 = scalar_lea.sflag [#allocation4], %s280
        %s282 = sand.u32 %s106, 1
        %s283 = smul.addr %s282, 24
        %s284 = scalar_lea.vmem [#allocation7], %s283
        // Predicated region
        $region45: #{tpu_custom_call.1} parent=27 // pred_check
          %p285 = pneg %p116
        $region46: #{tpu_custom_call.1} parent=27 // pred_check_branch
          %287 = sbr.rel (%p285) target = $region48
        $region47: #{tpu_custom_call.1} parent=27 // pred_region
          %s289 = ssub.s32 384, 384
          %290 = vsyncadd %s281, %s289
          %s291 = smul.addr %s26, 3
          %s292 = smul.addr %s291, 128
          %s293 = scalar_lea.hbm %s2, %s292
          %s294 = sshll.u32 %s284, 4
          %s295 = int_to_ptr.vmem [resolvable:$true] %s294
          %300 = dma.vmem_to_hbm [thread:$0]  %s295, 384, %s293, %s281, 128, 128, 8
        $region48: #{tpu_custom_call.1} parent=27 // pred_fallthru
          _
      $region28: #{tpu_custom_call.1} parent=5 // pred_fallthru
        _
      %p301 = scmp.le.s32.totalorder 2, %s17
      // Predicated region
      $region49: #{tpu_custom_call.1} parent=5 // pred_check
        %p302 = pneg %p301
      $region50: #{tpu_custom_call.1} parent=5 // pred_check_branch
        %304 = sbr.rel (%p302) target = $region52
      $region51: #{tpu_custom_call.1} parent=5 // pred_region
        %s305 = ssub.s32 %s17, 2
        // Predicated region
        $region53: #{tpu_custom_call.1} parent=51 // pred_check
          %p306 = pneg %p122
        $region54: #{tpu_custom_call.1} parent=51 // pred_check_branch
          %308 = sbr.rel (%p306) target = $region56
        $region55: #{tpu_custom_call.1} parent=51 // pred_region
          %s309 = sand.u32 %s107, 1
          %s310 = scalar_lea.sflag [#allocation4], %s309
          %s311 = sand.u32 %s107, 1
          %s312 = smul.addr %s311, 24
          %s313 = scalar_lea.vmem [#allocation7], %s312
          %314 = dma.done %s310, 384
        $region56: #{tpu_custom_call.1} parent=51 // pred_fallthru
          _
      $region52: #{tpu_custom_call.1} parent=5 // pred_fallthru
        _
    $region6: #{tpu_custom_call.1} parent=1 // loop_footer
      %s21 = sadd.s32 1, %s17
    $region7: #{tpu_custom_call.1} parent=1 // loop_footer_branch
      %16 = sbr.rel target = $region3
    $region8: #{tpu_custom_call.1} parent=1 // loop_exit
      _
    %315 = vsyncpa [#allocation3], 1
    %s316 = scalar_lea.sflag [#allocation3], 1
    %317 = vsyncpa %s316, 1
    %318 = vsyncpa [#allocation6], 1
    %s319 = scalar_lea.sflag [#allocation6], 1
    %320 = vsyncpa %s319, 1
    %321 = vsyncpa [#allocation4], 1
    %s322 = scalar_lea.sflag [#allocation4], 1
    %323 = vsyncpa %s322, 1

</llo_original>
